<compile_context>
chip_gen: v5e
topology: v5e:2x2
jax: 0.10.0
libtpu: 0.0.40
codegen_flags: <defaults>
</compile_context>

<pallas_src>
import functools

import jax
import jax.numpy as jnp
from jax.experimental import pallas as pl
from jax.experimental.pallas import tpu as pltpu


def _linear_kernel(x_ref, w_ref, b_ref, o_ref, acc_ref):
    """One (tm, tn) output tile, accumulated over the K grid axis."""
    k = pl.program_id(2)

    @pl.when(k == 0)
    def _():
        # Bias-as-init: start the accumulator at the broadcast bias row, which
        # removes a full (tm, tn) VPU add pass from the epilogue.
        acc_ref[...] = jnp.broadcast_to(
            b_ref[...].astype(jnp.float32), acc_ref.shape
        )

    # MXU matmul with f32 accumulation.
    acc_ref[...] += jnp.dot(
        x_ref[...], w_ref[...], preferred_element_type=jnp.float32
    )

    @pl.when(k == pl.num_programs(2) - 1)
    def _():
        o_ref[...] = acc_ref[...].astype(o_ref.dtype)


def _pick_tk(K, tk_default):
    """Largest K tile <= tk_default that divides K exactly.

    K must be tiled exactly: Pallas pads ragged edge *input* blocks with
    undefined data, which would corrupt a reduction over K (unlike ragged
    M/N edges, whose garbage only lands in masked-out output elements).
    """
    if K <= tk_default:
        return K
    if K % tk_default == 0:
        return tk_default
    for cand in range(tk_default, 0, -128):
        if cand > 0 and K % cand == 0:
            return cand
    return K


@functools.partial(
    jax.jit, static_argnames=("tm", "tn", "tk", "use_bf16_mxu", "vmem_limit_bytes")
)
def linear(
    x,
    w,
    b,
    *,
    tm=256,
    tn=256,
    tk=512,
    use_bf16_mxu=False,
    vmem_limit_bytes=32 * 1024 * 1024,
):
    """x: (M, K), w: (K, N), b: (N,) -> (M, N). Matches torch: x.mm(w) + b."""
    M, K = x.shape
    K2, N = w.shape
    assert K == K2, "in_features mismatch"

    out_dtype = x.dtype
    b2d = b.reshape(1, N)  # lane-dense (1, N) bias row

    # Clamp tiles to the problem size; keep them MXU/lane aligned when possible.
    tm = min(tm, M)
    tn = min(tn, N)
    tk = _pick_tk(K, tk)

    if use_bf16_mxu:
        # ~2-4x MXU throughput on v6e/v7x; f32 accumulation is kept in-kernel.
        x = x.astype(jnp.bfloat16)
        w = w.astype(jnp.bfloat16)

    # Grid: output tiles (parallel, megacore-shardable) with the K reduction
    # axis last ("arbitrary"). For typical inference Linears M is small, so
    # M/tm ~ 1 and the weight slab is streamed from HBM essentially once.
    grid = (pl.cdiv(M, tm), pl.cdiv(N, tn), pl.cdiv(K, tk))

    bytes_accessed = (
        x.size * x.dtype.itemsize
        + w.size * w.dtype.itemsize
        + b2d.size * b2d.dtype.itemsize
        + M * N * jnp.dtype(out_dtype).itemsize
    )
    cost = pl.CostEstimate(
        flops=2 * M * N * K, transcendentals=0, bytes_accessed=bytes_accessed
    )

    return pl.pallas_call(
        _linear_kernel,
        out_shape=jax.ShapeDtypeStruct((M, N), out_dtype),
        grid_spec=pltpu.PrefetchScalarGridSpec(
            num_scalar_prefetch=0,
            grid=grid,
            in_specs=[
                pl.BlockSpec((tm, tk), lambda i, j, k: (i, k)),  # x tile
                pl.BlockSpec((tk, tn), lambda i, j, k: (k, j)),  # w tile
                pl.BlockSpec((1, tn), lambda i, j, k: (0, j)),   # bias row
            ],
            out_specs=pl.BlockSpec((tm, tn), lambda i, j, k: (i, j)),
            scratch_shapes=[pltpu.VMEM((tm, tn), jnp.float32)],  # f32 accumulator
        ),
        compiler_params=pltpu.CompilerParams(
            dimension_semantics=("parallel", "parallel", "arbitrary"),
            vmem_limit_bytes=vmem_limit_bytes,
        ),
        cost_estimate=cost,
    )(x, w, b2d)


if __name__ == "__main__":
    # Small shapes consistent with the module: batch=8, in_features=32, out_features=128
    M, K, N = 8, 32, 128
    key = jax.random.PRNGKey(0)
    kx, kw, kb = jax.random.split(key, 3)

    x = jax.random.normal(kx, (M, K), dtype=jnp.float32)
    w = jax.random.normal(kw, (K, N), dtype=jnp.float32)  # matches t.randn(in, out)
    b = jax.random.normal(kb, (N,), dtype=jnp.float32)    # matches t.randn(out)

    out = linear(x, w, b)
    jax.block_until_ready(out)

    # Sanity check against plain JAX reference (torch: x.mm(w) + b.expand_as)
    ref = x @ w + b[None, :]
    assert out.shape == (M, N)
    assert jnp.allclose(out, ref, atol=1e-5, rtol=1e-5)

    print("KERNEL_OK")
</pallas_src>

<mosaic_0001>
module attributes {stable_mosaic.version = 11 : i64} {
  func.func @_linear_kernel(%arg0: i32, %arg1: i32, %arg2: i32, %arg3: memref<8x32xf32, #tpu.memory_space<vmem>>, %arg4: memref<32x128xf32, #tpu.memory_space<vmem>>, %arg5: memref<1x128xf32, #tpu.memory_space<vmem>>, %arg6: memref<8x128xf32, #tpu.memory_space<vmem>>, %arg7: memref<8x128xf32, #tpu.memory_space<vmem>>) attributes {dimension_semantics = [#tpu.dimension_semantics<parallel>, #tpu.dimension_semantics<parallel>, #tpu.dimension_semantics<arbitrary>], iteration_bounds = array<i64: 1, 1, 1>, scalar_prefetch = 0 : i64, scratch_operands = 1 : i64, tpu.core_type = #tpu.core_type<tc>, window_params = [{transform_indices = @transform_0, window_bounds = array<i64: 8, 32>}, {transform_indices = @transform_1, window_bounds = array<i64: 32, 128>}, {transform_indices = @transform_2, window_bounds = array<i64: 1, 128>}, {transform_indices = @transform_3, window_bounds = array<i64: 8, 128>}]} {
    %c0_i32 = arith.constant 0 : i32
    %0 = arith.cmpi eq, %arg2, %c0_i32 : i32
    %1 = arith.extui %0 : i1 to i32
    %c0_i32_0 = arith.constant 0 : i32
    %2 = arith.cmpi ne, %1, %c0_i32_0 : i32
    scf.if %2 {
      %c0_10 = arith.constant 0 : index
      %c0_11 = arith.constant 0 : index
      %12 = vector.load %arg5[%c0_10, %c0_11] : memref<1x128xf32, #tpu.memory_space<vmem>>, vector<1x128xf32>
      %13 = vector.shape_cast %12 : vector<1x128xf32> to vector<1x128xf32>
      %14 = vector.broadcast %13 : vector<1x128xf32> to vector<8x128xf32>
      %c0_12 = arith.constant 0 : index
      %c0_13 = arith.constant 0 : index
      %15 = vector.load %arg7[%c0_12, %c0_13] : memref<8x128xf32, #tpu.memory_space<vmem>>, vector<8x128xf32>
      tpu.vector_store %arg7[%c0_12, %c0_13], %14 {strides = array<i32>} : memref<8x128xf32, #tpu.memory_space<vmem>>, vector<8x128xf32>,
    } else {
    }
    %c0 = arith.constant 0 : index
    %c0_1 = arith.constant 0 : index
    %3 = vector.load %arg7[%c0, %c0_1] : memref<8x128xf32, #tpu.memory_space<vmem>>, vector<8x128xf32>
    %c0_2 = arith.constant 0 : index
    %c0_3 = arith.constant 0 : index
    %4 = vector.load %arg3[%c0_2, %c0_3] : memref<8x32xf32, #tpu.memory_space<vmem>>, vector<8x32xf32>
    %c0_4 = arith.constant 0 : index
    %c0_5 = arith.constant 0 : index
    %5 = vector.load %arg4[%c0_4, %c0_5] : memref<32x128xf32, #tpu.memory_space<vmem>>, vector<32x128xf32>
    %cst = arith.constant dense<0.000000e+00> : vector<8x128xf32>
    %6 = tpu.matmul %4, %5, %cst {dimension_numbers = #tpu.dot_dimension_numbers<[1], [0], [0], [1], [0, 0, 1, 1], [], []>} : vector<8x32xf32>, vector<32x128xf32>, vector<8x128xf32> -> vector<8x128xf32>
    %7 = arith.addf %3, %6 : vector<8x128xf32>
    %c0_6 = arith.constant 0 : index
    %c0_7 = arith.constant 0 : index
    %8 = vector.load %arg7[%c0_6, %c0_7] : memref<8x128xf32, #tpu.memory_space<vmem>>, vector<8x128xf32>
    tpu.vector_store %arg7[%c0_6, %c0_7], %7 {strides = array<i32>} : memref<8x128xf32, #tpu.memory_space<vmem>>, vector<8x128xf32>,
    %c0_i32_8 = arith.constant 0 : i32
    %9 = arith.cmpi eq, %arg2, %c0_i32_8 : i32
    %10 = arith.extui %9 : i1 to i32
    %c0_i32_9 = arith.constant 0 : i32
    %11 = arith.cmpi ne, %10, %c0_i32_9 : i32
    scf.if %11 {
      %c0_10 = arith.constant 0 : index
      %c0_11 = arith.constant 0 : index
      %12 = vector.load %arg7[%c0_10, %c0_11] : memref<8x128xf32, #tpu.memory_space<vmem>>, vector<8x128xf32>
      %c0_12 = arith.constant 0 : index
      %c0_13 = arith.constant 0 : index
      %13 = vector.load %arg6[%c0_12, %c0_13] : memref<8x128xf32, #tpu.memory_space<vmem>>, vector<8x128xf32>
      tpu.vector_store %arg6[%c0_12, %c0_13], %12 {strides = array<i32>} : memref<8x128xf32, #tpu.memory_space<vmem>>, vector<8x128xf32>,
    } else {
    }
    return
  }
  func.func @transform_0(%arg0: i32, %arg1: i32, %arg2: i32) -> (i32, i32) {
    %c0_i32 = arith.constant 0 : i32
    return %arg0, %arg2 : i32, i32
  }
  func.func @transform_1(%arg0: i32, %arg1: i32, %arg2: i32) -> (i32, i32) {
    %c0_i32 = arith.constant 0 : i32
    return %arg2, %arg1 : i32, i32
  }
  func.func @transform_2(%arg0: i32, %arg1: i32, %arg2: i32) -> (i32, i32) {
    %c0_i32 = arith.constant 0 : i32
    %c0_i32_0 = arith.constant 0 : i32
    return %c0_i32, %arg1 : i32, i32
  }
  func.func @transform_3(%arg0: i32, %arg1: i32, %arg2: i32) -> (i32, i32) {
    %c0_i32 = arith.constant 0 : i32
    return %arg0, %arg1 : i32, i32
  }
}

</mosaic_0001>

<llo_original>
// kernel: linear.1
$region0: #{linear.1}
  #allocation0 [shape = 'u32[]', space=smem, size = 0x4, offset = 0x4, fixed_abs, tag = 'smem constant byte address 0x4 - core index']
  #allocation1 [shape = 'u32[72,128]{1,0:T(1,128)}', space=vmem, size = 0x9000, scoped, tag = 'internal scratch']
  #allocation2 [shape = 'f32[8,128]{1,0:T(8,128)}', space=vmem, size = 0x1000, scoped, tag = 'scratch operand']
  %s0 = inlined_call_operand.hbm [shape: f32[8,32], index: 0, kind: input, shape index: {}]
  %s1 = inlined_call_operand.hbm [shape: f32[32,128], index: 1, kind: input, shape index: {}]
  %s2 = inlined_call_operand.vmem [shape: f32[1,128], index: 2, kind: input, shape index: {}]
  %s3 = inlined_call_operand.hbm [shape: f32[8,128], index: 3, kind: output, shape index: {}]
  %s4 = sld [smem:[#allocation0]]
  $region38: #{linear.1} parent=0
    _
  %s6 = ssub.s32 1, %s4
  %s7 = scalar_select 0, %s6, %s4
  $region1: #{linear.1} parent=0
    #allocation3 [shape = 'u8[4096]{0}', space=vmem, size = 0x1000, scoped, tag = 'input window, operand 0, single buffered']
    #allocation4 [shape = 's32[1]{0}', space=sflag, size = 0x4, scoped, tag = 'scoped memory for linear.1']
    #allocation5 [shape = 's32[1]{0}', space=sflag, size = 0x4, scoped, tag = 'scoped memory for linear.1']
    #allocation6 [shape = 'u8[16384]{0}', space=vmem, size = 0x4000, scoped, tag = 'input window, operand 1, single buffered']
    #allocation7 [shape = 's32[1]{0}', space=sflag, size = 0x4, scoped, tag = 'scoped memory for linear.1']
    #allocation8 [shape = 'u8[4096]{0}', space=vmem, size = 0x1000, scoped, tag = 'output window, operand 0, single buffered']
    %8 = vsyncpa [#allocation4], 0
    %9 = vsyncpa [#allocation7], 0
    %10 = vsyncpa [#allocation5], 0
    // Predicated region
    $region2: #{linear.1} parent=1 // pred_check
      _
    $region3: #{linear.1} parent=1 // pred_check_branch
      %12 = sbr.rel (0) target = $region5
    $region4: #{linear.1} parent=1 // pred_region
      %14 = vsyncadd [#allocation4], 0
      %s16 = sshll.u32 %s0, 4
      %s17 = int_to_ptr.hbm [resolvable:$true] %s16
      %s18 = sshll.u32 [#allocation3], 4
      %s19 = int_to_ptr.vmem [resolvable:$true] %s18
      %21 = dma.hbm_to_vmem [thread:$0]  %s17, 128, %s19, [#allocation4]
    $region5: #{linear.1} parent=1 // pred_fallthru
      _
    // Predicated region
    $region6: #{linear.1} parent=1 // pred_check
      _
    $region7: #{linear.1} parent=1 // pred_check_branch
      %23 = sbr.rel (0) target = $region9
    $region8: #{linear.1} parent=1 // pred_region
      %25 = vsyncadd [#allocation7], 0
      %s26 = sshll.u32 %s1, 4
      %s27 = int_to_ptr.hbm [resolvable:$true] %s26
      %s28 = sshll.u32 [#allocation6], 4
      %s29 = int_to_ptr.vmem [resolvable:$true] %s28
      %34 = dma.hbm_to_vmem [thread:$0]  %s27, 512, %s29, [#allocation7], 128, 128, 8
    $region9: #{linear.1} parent=1 // pred_fallthru
      _
    // Predicated region
    $region10: #{linear.1} parent=1 // pred_check
      _
    $region11: #{linear.1} parent=1 // pred_check_branch
      %36 = sbr.rel (0) target = $region13
    $region12: #{linear.1} parent=1 // pred_region
      _
    $region13: #{linear.1} parent=1 // pred_fallthru
      _
    // Predicated region
    $region14: #{linear.1} parent=1 // pred_check
      _
    $region15: #{linear.1} parent=1 // pred_check_branch
      %38 = sbr.rel (0) target = $region17
    $region16: #{linear.1} parent=1 // pred_region
      %40 = dma.done [#allocation4], 128
    $region17: #{linear.1} parent=1 // pred_fallthru
      _
    // Predicated region
    $region18: #{linear.1} parent=1 // pred_check
      _
    $region19: #{linear.1} parent=1 // pred_check_branch
      %42 = sbr.rel (0) target = $region21
    $region20: #{linear.1} parent=1 // pred_region
      %44 = dma.done [#allocation7], 512
    $region21: #{linear.1} parent=1 // pred_fallthru
      _
    %p45 = scmp.eq.s32.totalorder 0, 0
    // Predicated region
    $region22: #{linear.1} parent=1 // pred_check
      %p46 = pneg %p45
    $region23: #{linear.1} parent=1 // pred_check_branch
      %48 = sbr.rel (%p46) target = $region25
    $region24: #{linear.1} parent=1 // pred_region
      %v49 = vld [vmem:[%s2] sm:$0x1]
      %v51 = vperm.slane %v49, 0
      %53 = vst [vmem:[#allocation2] sm:$0xff] %v51
    $region25: #{linear.1} parent=1 // pred_fallthru
      _
    %v54 = vld [vmem:[#allocation2] sm:$0xff]
    %v55 = vld [vmem:[#allocation3] sm:$0xff]
    %v56 = vld [vmem:[#allocation6] sm:$0xff]
    %v57 = vld [vmem:[#allocation6 + $0x8] sm:$0xff]
    %v58 = vld [vmem:[#allocation6 + $0x10] sm:$0xff]
    %v59 = vld [vmem:[#allocation6 + $0x18] sm:$0xff]
    %vm60 = vcmask 261120
    %v62 = vsel %vm60, %v55, 0
    %64 = vmatpush.msra.mxu0 0.0
    %65 = vmatpush.msra.mxu0 0.0
    %66 = vmatpush.msra.mxu0 0.0
    %67 = vmatpush.msra.mxu0 0.0
    %68 = vmatpush.msra.mxu0 0.0
    %69 = vmatpush.msra.mxu0 0.0
    %70 = vmatpush.msra.mxu0 0.0
    %71 = vmatpush.msra.mxu0 0.0
    %72 = vmatpush.msra.mxu0 0.0
    %73 = vmatpush.msra.mxu0 0.0
    %74 = vmatpush.msra.mxu0 0.0
    %75 = vmatpush.msra.mxu0 0.0
    %76 = vmatpush.msra.mxu0 %v59
    %77 = vmatpush.msra.mxu0 %v58
    %78 = vmatpush.msra.mxu0 %v57
    %79 = vmatpush.msra.mxu0 %v56
    %80 = vmatmul.f32.gmra.mxu0 %v62
    %v81 = vpop.f32.mrf.mxu0
    %v82 = vadd.f32 0.0, %v81
    %83 = vdwg.mxu0
    %v84 = vadd.f32 %v54, %v82
    %85 = vst [vmem:[#allocation2] sm:$0xff] %v84
    // Predicated region
    $region26: #{linear.1} parent=1 // pred_check
      %p86 = pneg %p45
    $region27: #{linear.1} parent=1 // pred_check_branch
      %88 = sbr.rel (%p86) target = $region29
    $region28: #{linear.1} parent=1 // pred_region
      %v89 = vld [vmem:[#allocation2] sm:$0xff]
      %90 = vst [vmem:[#allocation8] sm:$0xff] %v89
    $region29: #{linear.1} parent=1 // pred_fallthru
      _
    // Predicated region
    $region30: #{linear.1} parent=1 // pred_check
      _
    $region31: #{linear.1} parent=1 // pred_check_branch
      %92 = sbr.rel (0) target = $region33
    $region32: #{linear.1} parent=1 // pred_region
      %94 = vsyncadd [#allocation5], 0
      %s96 = sshll.u32 [#allocation8], 4
      %s97 = int_to_ptr.vmem [resolvable:$true] %s96
      %s98 = sshll.u32 %s3, 4
      %s99 = int_to_ptr.hbm [resolvable:$true] %s98
      %101 = dma.vmem_to_hbm [thread:$0]  %s97, 128, %s99, [#allocation5]
    $region33: #{linear.1} parent=1 // pred_fallthru
      _
    // Predicated region
    $region34: #{linear.1} parent=1 // pred_check
      _
    $region35: #{linear.1} parent=1 // pred_check_branch
      %103 = sbr.rel (0) target = $region37
    $region36: #{linear.1} parent=1 // pred_region
      %105 = dma.done [#allocation5], 128
    $region37: #{linear.1} parent=1 // pred_fallthru
      _
    %106 = vsyncpa [#allocation4], 1
    %107 = vsyncpa [#allocation7], 1
    %108 = vsyncpa [#allocation5], 1

</llo_original>
